<compile_context>
chip_gen: v7x
topology: tpu7x:2x2x1
jax: 0.10.0
libtpu: 0.0.40
codegen_flags: <defaults>
</compile_context>

<pallas_src>
import functools

import jax
import jax.numpy as jnp
import numpy as np
from jax.experimental import pallas as pl
from jax.experimental.pallas import tpu as pltpu


def _round_up(x, m):
    return ((x + m - 1) // m) * m


def align_moe_kernel(x_ref, w_ref, b_ref, seg_ref, exp_ref, red_ref, o_ref, *, e_cols):
    """One row-tile of Align_MoE (softmax gate selection), fully lane-aligned.

    x_ref   : (TM, 3H)        bf16  flattened input rows
    w_ref   : (3H, 3EH + 3E)  bf16  fused [weight[m]-scaled expert | block-diag gate] weights
    b_ref   : (1,  3EH + 3E)  f32   fused biases (expert part pre-scaled by weight[m])
    seg_ref : (3E, 3E)        f32   0/1 same-modality matrix (segment softmax sums)
    exp_ref : (3E, 3EH)       f32   0/1 gate -> expert-column expansion
    red_ref : (3EH, 3H)       bf16  0/1 expert-sum reduction
    o_ref   : (TM, 3H)        f32   packed outputs [id | txt | img]
    """
    x = x_ref[...]

    # One fused MXU pass: expert outputs and gate logits in a single matmul.
    y = jnp.dot(x, w_ref[...], preferred_element_type=jnp.float32) + b_ref[...]
    ye = y[:, :e_cols]                      # (TM, 3EH) -- vreg-aligned slice (3EH % 128 == 0)
    logits = y[:, e_cols:]                  # (TM, 3E)

    # Per-modality softmax without per-modality slicing: subtracting the global
    # row max is shift-invariant within each segment; segment sums come from a
    # tiny 0/1 matmul. Exact divide keeps gates summing to exactly 1 (f32).
    l = logits - jnp.max(logits, axis=-1, keepdims=True)
    el = jnp.exp(l)
    s = jnp.dot(el, seg_ref[...], preferred_element_type=jnp.float32)   # (TM, 3E)
    p = el / s                                                           # softmax probs, f32

    # Lane-aligned gate combine: expand gates to expert-output columns on the
    # MXU, one bulk VPU multiply, then expert-sum with a 0/1 reduction matmul.
    gate_exp = jnp.dot(p, exp_ref[...], preferred_element_type=jnp.float32)   # (TM, 3EH)
    weighted = (ye * gate_exp).astype(red_ref.dtype)                          # bf16 for MXU rate
    o_ref[...] = jnp.dot(weighted, red_ref[...], preferred_element_type=jnp.float32)


def prepare_align_moe_params(expert_w, expert_b, gate_w, gate_b, weight,
                             *, hidden_size, expert_num):
    """Precompute the fused kernel parameters ONCE (hoisted off the per-call path).

    expert_w : (E, 3H, 3H)  with y_e = x @ expert_w[e]   (transposed vs. nn.Linear.weight)
    expert_b : (E, 3H)
    gate_w   : (3, H, E)    stacked [id, txt, img]; logits_m = x_m @ gate_w[m]
    gate_b   : (3, E)
    weight   : (3,)         per-modality scalar; folded into the expert columns
                            (softmax gates sum to 1, so weight[m] distributes).
    """
    H, E = hidden_size, expert_num
    D, EH = 3 * H, expert_num * hidden_size
    weight = weight.astype(jnp.float32)

    # Fused expert weight with modality-major columns: col = m*EH + e*H + h.
    Wf = jnp.transpose(expert_w, (1, 0, 2)).reshape(D, E, 3, H)          # [d, e, m, h]
    Wf = jnp.transpose(Wf, (0, 2, 1, 3)) * weight.reshape(1, 3, 1, 1)    # [d, m, e, h]
    Wf = Wf.reshape(D, 3 * EH)
    bf = jnp.transpose(expert_b.reshape(E, 3, H), (1, 0, 2)) * weight.reshape(3, 1, 1)
    bf = bf.reshape(1, 3 * EH)

    # Gate weights appended as extra columns (block-diagonal -> per-modality x slice).
    Wg = jax.scipy.linalg.block_diag(gate_w[0], gate_w[1], gate_w[2])    # (D, 3E)
    bg = gate_b.reshape(1, 3 * E)

    W = jnp.concatenate([Wf, Wg], axis=1).astype(jnp.bfloat16)           # (D, 3EH + 3E)
    b = jnp.concatenate([bf, bg], axis=1).astype(jnp.float32)

    # Constant 0/1 combine matrices (depend only on H and E; exact in bf16/f32).
    gate_idx = np.arange(3 * E)
    mod_of_gate = gate_idx // E
    seg_mat = (mod_of_gate[:, None] == mod_of_gate[None, :]).astype(np.float32)

    col = np.arange(3 * EH)
    gate_of_col = (col // EH) * E + (col % EH) // H
    expand_mat = (gate_idx[:, None] == gate_of_col[None, :]).astype(np.float32)

    out_of_col = (col // EH) * H + (col % H)
    reduce_mat = (out_of_col[:, None] == np.arange(D)[None, :]).astype(np.float32)

    return dict(W=W, b=b,
                seg_mat=jnp.asarray(seg_mat),
                expand_mat=jnp.asarray(expand_mat),
                reduce_mat=jnp.asarray(reduce_mat, dtype=jnp.bfloat16),
                hidden_size=H, expert_num=E)


def align_moe(vector, params, *, tm=2048):
    """vector: (B, S, 3H). Returns the packed (B, S, 3H) output [id | txt | img]."""
    B, S, D = vector.shape
    H = params["hidden_size"]
    E = params["expert_num"]
    assert D == 3 * H
    M = B * S
    EH = E * H

    # Row tile: large (amortize ~0.35us/grid-step, fill MXU sublanes), multiple
    # of 8, but keep >= 2 tiles so v7x can shard the "parallel" axis over both
    # TensorCores.  Sweep tm in {1024, 2048, 4096} for the production shape.
    tm_cap = max(8, _round_up(-(-M // 2), 8))
    tm = _round_up(max(8, min(tm, tm_cap)), 8)
    n_tiles = pl.cdiv(M, tm)
    M_pad = n_tiles * tm

    # bf16 activations halve the streamed x bytes; MXU accumulates in f32.
    x = vector.reshape(M, D).astype(jnp.bfloat16)
    if M_pad != M:
        x = jnp.pad(x, ((0, M_pad - M), (0, 0)))

    W, b = params["W"], params["b"]
    seg_mat, expand_mat, reduce_mat = (params["seg_mat"], params["expand_mat"],
                                       params["reduce_mat"])

    kernel = functools.partial(align_moe_kernel, e_cols=3 * EH)

    flops = 2 * M_pad * (D * (3 * EH + 3 * E)     # fused expert + gate matmul
                         + 3 * E * 3 * E          # segment-sum matmul
                         + 3 * E * 3 * EH         # gate expansion matmul
                         + 3 * EH * D)            # expert-sum reduction matmul
    transcendentals = M_pad * 3 * E               # exp (plus 3E exact divides)
    bytes_accessed = (2 * M_pad * D + 4 * M_pad * D + 2 * W.size + 4 * b.size
                      + 4 * seg_mat.size + 4 * expand_mat.size + 2 * reduce_mat.size)

    out = pl.pallas_call(
        kernel,
        out_shape=jax.ShapeDtypeStruct((M_pad, D), jnp.float32),
        grid_spec=pltpu.PrefetchScalarGridSpec(
            num_scalar_prefetch=0,
            grid=(n_tiles,),
            in_specs=[
                pl.BlockSpec((tm, D), lambda i: (i, 0)),                # x rows (streamed)
                pl.BlockSpec((D, 3 * EH + 3 * E), lambda i: (0, 0)),    # fused weights (resident)
                pl.BlockSpec((1, 3 * EH + 3 * E), lambda i: (0, 0)),    # fused biases
                pl.BlockSpec((3 * E, 3 * E), lambda i: (0, 0)),         # segment-sum matrix
                pl.BlockSpec((3 * E, 3 * EH), lambda i: (0, 0)),        # gate expansion matrix
                pl.BlockSpec((3 * EH, D), lambda i: (0, 0)),            # expert-sum reduction
            ],
            out_specs=pl.BlockSpec((tm, D), lambda i: (i, 0)),
        ),
        compiler_params=pltpu.CompilerParams(
            dimension_semantics=("parallel",),     # independent row tiles (v7x: 2 TCs)
            # Worst-case live set at tm=2048 is ~20 MiB (in/out double buffers +
            # f32 intermediates); 64 MiB clears the v5e 16 MiB scoped default and
            # stays within v7x's 64 MiB physical VMEM.
            vmem_limit_bytes=64 * 1024 * 1024),
        cost_estimate=pl.CostEstimate(flops=flops,
                                      transcendentals=transcendentals,
                                      bytes_accessed=bytes_accessed),
    )(x, W, b, seg_mat, expand_mat, reduce_mat)

    return out[:M].reshape(B, S, D)


def align_moe_outputs(vector, params, *, tm=2048):
    """Matches the PyTorch module's return: [out_id, out_txt, out_img], each (B, S, H).

    Keep this jitted together with the consumer so the three slices fuse instead
    of re-materializing the packed output in HBM.
    """
    packed = align_moe(vector, params, tm=tm)
    H = params["hidden_size"]
    return [packed[..., :H], packed[..., H:2 * H], packed[..., 2 * H:]]


def align_moe_ref(vector, expert_w, expert_b, gate_w, gate_b, weight, hidden_size):
    """Pure-JAX f32 reference mirroring the PyTorch forward."""
    H = hidden_size
    eo = jnp.einsum('bsd,edf->bsef', vector, expert_w) + expert_b[None, None]
    outs = []
    for m in range(3):
        xm = vector[:, :, m * H:(m + 1) * H]
        logits = jnp.einsum('bsh,he->bse', xm, gate_w[m]) + gate_b[m]
        g = jax.nn.softmax(logits, axis=-1)
        o = weight[m] * jnp.sum(eo[:, :, :, m * H:(m + 1) * H] * g[..., None], axis=2)
        outs.append(o)
    return outs


if __name__ == "__main__":
    # config: start_expert_num=4, hidden_size=32, start_gate_selection='softmax',
    #         initializer_weight=[0.3, 0.3, 0.4]
    H, E = 32, 4
    D = 3 * H

    key = jax.random.PRNGKey(0)
    ks = jax.random.split(key, 8)

    # Deterministic synthetic parameters (nn.Linear-style uniform init).
    bound_e = 1.0 / np.sqrt(D)
    bound_g = 1.0 / np.sqrt(H)
    # expert_w stored transposed relative to PyTorch (so y = x @ W_e).
    expert_w = jax.random.uniform(ks[0], (E, D, D), jnp.float32, -bound_e, bound_e)
    expert_b = jax.random.uniform(ks[1], (E, D), jnp.float32, -bound_e, bound_e)
    # gate weights stacked as [id, txt, img]; each (H, E) so logits = x_slice @ Wg.
    gate_w = jax.random.uniform(ks[2], (3, H, E), jnp.float32, -bound_g, bound_g)
    gate_b = jax.random.uniform(ks[3], (3, E), jnp.float32, -bound_g, bound_g)
    weight = jnp.array([0.3, 0.3, 0.4], jnp.float32)  # config['initializer_weight']

    # Weight fusion runs ONCE (hoisted off the per-call path).
    params = prepare_align_moe_params(expert_w, expert_b, gate_w, gate_b, weight,
                                      hidden_size=H, expert_num=E)

    # Two shapes: one tile-aligned, one exercising the padded final tile (M=15).
    for (B, S) in [(2, 8), (3, 5)]:
        vector = jax.random.normal(ks[4], (B, S, D), jnp.float32)

        outs = align_moe_outputs(vector, params)
        outs = [jax.block_until_ready(o) for o in outs]

        refs = align_moe_ref(vector, expert_w, expert_b, gate_w, gate_b, weight, H)
        for o, r in zip(outs, refs):
            assert o.shape == (B, S, H)
            # Tolerance covers the bf16 activations/weights and the bf16 cast of
            # the gated expert outputs before the (exact 0/1) reduction matmul;
            # f32 accumulation + exact-divide softmax keep the error well inside.
            np.testing.assert_allclose(np.asarray(o), np.asarray(r),
                                       atol=2e-2, rtol=2e-2)

    print("KERNEL_OK")
</pallas_src>

<mosaic_0001>
module attributes {stable_mosaic.version = 11 : i64} {
  func.func @align_moe_kernel(%arg0: i32, %arg1: memref<8x96xbf16, #tpu.memory_space<vmem>>, %arg2: memref<96x396xbf16, #tpu.memory_space<vmem>>, %arg3: memref<1x396xf32, #tpu.memory_space<vmem>>, %arg4: memref<12x12xf32, #tpu.memory_space<vmem>>, %arg5: memref<12x384xf32, #tpu.memory_space<vmem>>, %arg6: memref<384x96xbf16, #tpu.memory_space<vmem>>, %arg7: memref<8x96xf32, #tpu.memory_space<vmem>>) attributes {dimension_semantics = [#tpu.dimension_semantics<parallel>], iteration_bounds = array<i64: 2>, scalar_prefetch = 0 : i64, scratch_operands = 0 : i64, tpu.core_type = #tpu.core_type<tc>, window_params = [{transform_indices = @transform_0, window_bounds = array<i64: 8, 96>}, {pipeline_mode = #tpu.pipeline_mode<synchronous>, transform_indices = @transform_1, window_bounds = array<i64: 96, 396>}, {pipeline_mode = #tpu.pipeline_mode<synchronous>, transform_indices = @transform_2, window_bounds = array<i64: 1, 396>}, {pipeline_mode = #tpu.pipeline_mode<synchronous>, transform_indices = @transform_3, window_bounds = array<i64: 12, 12>}, {pipeline_mode = #tpu.pipeline_mode<synchronous>, transform_indices = @transform_4, window_bounds = array<i64: 12, 384>}, {pipeline_mode = #tpu.pipeline_mode<synchronous>, transform_indices = @transform_5, window_bounds = array<i64: 384, 96>}, {transform_indices = @transform_6, window_bounds = array<i64: 8, 96>}]} {
    %c0 = arith.constant 0 : index
    %c0_0 = arith.constant 0 : index
    %0 = vector.load %arg1[%c0, %c0_0] : memref<8x96xbf16, #tpu.memory_space<vmem>>, vector<8x96xbf16>
    %c0_1 = arith.constant 0 : index
    %c0_2 = arith.constant 0 : index
    %1 = vector.load %arg2[%c0_1, %c0_2] : memref<96x396xbf16, #tpu.memory_space<vmem>>, vector<96x396xbf16>
    %cst = arith.constant dense<0.000000e+00> : vector<8x396xf32>
    %2 = tpu.matmul %0, %1, %cst {dimension_numbers = #tpu.dot_dimension_numbers<[1], [0], [0], [1], [0, 0, 1, 1], [], []>} : vector<8x96xbf16>, vector<96x396xbf16>, vector<8x396xf32> -> vector<8x396xf32>
    %c0_3 = arith.constant 0 : index
    %c0_4 = arith.constant 0 : index
    %3 = vector.load %arg3[%c0_3, %c0_4] : memref<1x396xf32, #tpu.memory_space<vmem>>, vector<1x396xf32>
    %4 = vector.broadcast %3 : vector<1x396xf32> to vector<8x396xf32>
    %5 = arith.addf %2, %4 : vector<8x396xf32>
    %6 = vector.extract_strided_slice %5 {offsets = [0, 0], sizes = [8, 384], strides = [1, 1]} : vector<8x396xf32> to vector<8x384xf32>
    %7 = vector.extract_strided_slice %5 {offsets = [0, 384], sizes = [8, 12], strides = [1, 1]} : vector<8x396xf32> to vector<8x12xf32>
    %cst_5 = arith.constant dense<0xFF800000> : vector<8xf32>
    %8 = vector.multi_reduction <maximumf>, %7, %cst_5 [1] : vector<8x12xf32> to vector<8xf32>
    %9 = vector.shape_cast %8 : vector<8xf32> to vector<8x1xf32>
    %10 = vector.broadcast %9 : vector<8x1xf32> to vector<8x12xf32>
    %11 = arith.subf %7, %10 : vector<8x12xf32>
    %12 = math.exp %11 : vector<8x12xf32>
    %c0_6 = arith.constant 0 : index
    %c0_7 = arith.constant 0 : index
    %13 = vector.load %arg4[%c0_6, %c0_7] : memref<12x12xf32, #tpu.memory_space<vmem>>, vector<12x12xf32>
    %cst_8 = arith.constant dense<0.000000e+00> : vector<8x12xf32>
    %14 = tpu.matmul %12, %13, %cst_8 {dimension_numbers = #tpu.dot_dimension_numbers<[1], [0], [0], [1], [0, 0, 1, 1], [], []>} : vector<8x12xf32>, vector<12x12xf32>, vector<8x12xf32> -> vector<8x12xf32>
    %15 = arith.divf %12, %14 : vector<8x12xf32>
    %c0_9 = arith.constant 0 : index
    %c0_10 = arith.constant 0 : index
    %16 = vector.load %arg5[%c0_9, %c0_10] : memref<12x384xf32, #tpu.memory_space<vmem>>, vector<12x384xf32>
    %cst_11 = arith.constant dense<0.000000e+00> : vector<8x384xf32>
    %17 = tpu.matmul %15, %16, %cst_11 {dimension_numbers = #tpu.dot_dimension_numbers<[1], [0], [0], [1], [0, 0, 1, 1], [], []>} : vector<8x12xf32>, vector<12x384xf32>, vector<8x384xf32> -> vector<8x384xf32>
    %18 = arith.mulf %6, %17 : vector<8x384xf32>
    %19 = arith.truncf %18 : vector<8x384xf32> to vector<8x384xbf16>
    %c0_12 = arith.constant 0 : index
    %c0_13 = arith.constant 0 : index
    %20 = vector.load %arg6[%c0_12, %c0_13] : memref<384x96xbf16, #tpu.memory_space<vmem>>, vector<384x96xbf16>
    %cst_14 = arith.constant dense<0.000000e+00> : vector<8x96xf32>
    %21 = tpu.matmul %19, %20, %cst_14 {dimension_numbers = #tpu.dot_dimension_numbers<[1], [0], [0], [1], [0, 0, 1, 1], [], []>} : vector<8x384xbf16>, vector<384x96xbf16>, vector<8x96xf32> -> vector<8x96xf32>
    %c0_15 = arith.constant 0 : index
    %c0_16 = arith.constant 0 : index
    %22 = vector.load %arg7[%c0_15, %c0_16] : memref<8x96xf32, #tpu.memory_space<vmem>>, vector<8x96xf32>
    tpu.vector_store %arg7[%c0_15, %c0_16], %21 {strides = array<i32>} : memref<8x96xf32, #tpu.memory_space<vmem>>, vector<8x96xf32>,
    return
  }
  func.func @transform_0(%arg0: i32) -> (i32, i32) {
    %c0_i32 = arith.constant 0 : i32
    %c0_i32_0 = arith.constant 0 : i32
    return %arg0, %c0_i32 : i32, i32
  }
  func.func @transform_1(%arg0: i32) -> (i32, i32) {
    %c0_i32 = arith.constant 0 : i32
    %c0_i32_0 = arith.constant 0 : i32
    %c0_i32_1 = arith.constant 0 : i32
    return %c0_i32, %c0_i32_0 : i32, i32
  }
  func.func @transform_2(%arg0: i32) -> (i32, i32) {
    %c0_i32 = arith.constant 0 : i32
    %c0_i32_0 = arith.constant 0 : i32
    %c0_i32_1 = arith.constant 0 : i32
    return %c0_i32, %c0_i32_0 : i32, i32
  }
  func.func @transform_3(%arg0: i32) -> (i32, i32) {
    %c0_i32 = arith.constant 0 : i32
    %c0_i32_0 = arith.constant 0 : i32
    %c0_i32_1 = arith.constant 0 : i32
    return %c0_i32, %c0_i32_0 : i32, i32
  }
  func.func @transform_4(%arg0: i32) -> (i32, i32) {
    %c0_i32 = arith.constant 0 : i32
    %c0_i32_0 = arith.constant 0 : i32
    %c0_i32_1 = arith.constant 0 : i32
    return %c0_i32, %c0_i32_0 : i32, i32
  }
  func.func @transform_5(%arg0: i32) -> (i32, i32) {
    %c0_i32 = arith.constant 0 : i32
    %c0_i32_0 = arith.constant 0 : i32
    %c0_i32_1 = arith.constant 0 : i32
    return %c0_i32, %c0_i32_0 : i32, i32
  }
  func.func @transform_6(%arg0: i32) -> (i32, i32) {
    %c0_i32 = arith.constant 0 : i32
    %c0_i32_0 = arith.constant 0 : i32
    return %arg0, %c0_i32 : i32, i32
  }
}

</mosaic_0001>

<llo_original>
// kernel: tpu_custom_call.1
$region0: #{tpu_custom_call.1}
  #allocation0 [shape = 'u32[]', space=smem, size = 0x4, offset = 0x4, fixed_abs, tag = 'smem constant byte address 0x4 - core index']
  #allocation1 [shape = 'u32[144,128]{1,0:T(1,128)}', space=vmem, size = 0x12000, scoped, tag = 'internal scratch']
  %s0 = inlined_call_operand.hbm [shape: bf16[16,96], index: 0, kind: input, shape index: {}]
  %s1 = inlined_call_operand.hbm [shape: bf16[96,396], index: 1, kind: input, shape index: {}]
  %s2 = inlined_call_operand.hbm [shape: f32[1,396], index: 2, kind: input, shape index: {}]
  %s3 = inlined_call_operand.hbm [shape: f32[12,12], index: 3, kind: input, shape index: {}]
  %s4 = inlined_call_operand.hbm [shape: f32[12,384], index: 4, kind: input, shape index: {}]
  %s5 = inlined_call_operand.hbm [shape: bf16[384,96], index: 5, kind: input, shape index: {}]
  %s6 = inlined_call_operand.hbm [shape: f32[16,96], index: 6, kind: output, shape index: {}]
  %s7 = sld [smem:[#allocation0]]
  $region81: #{tpu_custom_call.1} parent=0
    _
  %s9 = ssub.s32 1, %s7
  %s10 = scalar_select 0, %s9, %s7
  $region1: #{tpu_custom_call.1} parent=0
    #allocation2 [shape = 'u8[4096]{0}', space=vmem, size = 0x1000, scoped, tag = 'input window, operand 0']
    #allocation3 [shape = 's32[2]{0}', space=sflag, size = 0x8, scoped, tag = 'scoped memory for tpu_custom_call.1']
    #allocation4 [shape = 's32[2]{0}', space=sflag, size = 0x8, scoped, tag = 'scoped memory for tpu_custom_call.1']
    #allocation5 [shape = 'u8[98304]{0}', space=vmem, size = 0x18000, scoped, tag = 'input window, operand 1, single buffered']
    #allocation6 [shape = 's32[1]{0}', space=sflag, size = 0x4, scoped, tag = 'scoped memory for tpu_custom_call.1']
    #allocation7 [shape = 'u8[2048]{0}', space=vmem, size = 0x800, scoped, tag = 'input window, operand 2, single buffered']
    #allocation8 [shape = 'u8[8192]{0}', space=vmem, size = 0x2000, scoped, tag = 'input window, operand 3, single buffered']
    #allocation9 [shape = 's32[1]{0}', space=sflag, size = 0x4, scoped, tag = 'scoped memory for tpu_custom_call.1']
    #allocation10 [shape = 'u8[24576]{0}', space=vmem, size = 0x6000, scoped, tag = 'input window, operand 4, single buffered']
    #allocation11 [shape = 'u8[98304]{0}', space=vmem, size = 0x18000, scoped, tag = 'input window, operand 5, single buffered']
    #allocation12 [shape = 's32[1]{0}', space=sflag, size = 0x4, scoped, tag = 'scoped memory for tpu_custom_call.1']
    #allocation13 [shape = 'u8[8192]{0}', space=vmem, size = 0x2000, scoped, tag = 'output window, operand 0']
    %11 = vsyncpa [#allocation3], 0
    %s12 = scalar_lea.sflag [#allocation3], 1
    %13 = vsyncpa %s12, 0
    %14 = vsyncpa [#allocation6], 0
    %15 = vsyncpa [#allocation9], 0
    %16 = vsyncpa [#allocation12], 0
    %17 = vsyncpa [#allocation4], 0
    %s18 = scalar_lea.sflag [#allocation4], 1
    %19 = vsyncpa %s18, 0
    loop: start=0, step=1, limit=4
    $region2: #{tpu_custom_call.1} parent=1 // loop_pre_header
      _
    $region3: #{tpu_custom_call.1} parent=1 // loop_header
      %s21 = sphi 0, %s25
      %p22 = scmp.ge.s32.totalorder %s21, 4
      %s31 = sphi 0, %s33
      %s34 = sphi 0, %s31
      %s35 = sphi 0, %s34
      %s51 = sphi 0, %s35
      %s55 = sphi 0, %s55
      %s57 = sphi 0, %s55
      %s58 = sphi 0, %s57
      %s72 = sphi 0, %s58
      %s76 = sphi 0, %s76
      %s78 = sphi 0, %s76
      %s79 = sphi 0, %s78
      %s93 = sphi 0, %s79
      %s97 = sphi 0, %s97
      %s99 = sphi 0, %s97
      %s100 = sphi 0, %s99
      %s114 = sphi 0, %s100
      %s118 = sphi 0, %s118
      %s120 = sphi 0, %s118
      %s121 = sphi 0, %s120
      %s135 = sphi 0, %s121
      %s139 = sphi 0, %s139
      %s141 = sphi 0, %s139
      %s142 = sphi 0, %s141
      %s156 = sphi 0, %s142
      %s162 = sphi 0, %s164
      %s165 = sphi 0, %s162
      %s166 = sphi 0, %s165
      %s182 = sphi 0, %s166
    $region4: #{tpu_custom_call.1} parent=1 // loop_header_branch
      %24 = sbr.rel (%p22) target = $region8
    $region5: #{tpu_custom_call.1} parent=1 // loop_body
      %s26 = ssub.s32 %s21, 1
      %s27 = ssub.s32 %s21, 2
      %s28 = sadd.s32 %s21, 1
      %s29 = ssub.s32 %s21, %s28
      %p30 = scmp.eq.s32.totalorder %s29, 0
      %s32 = sadd.s32 %s31, 1
      %s33 = scalar_select %p30, %s31, %s32
      %p36 = pneg %p30
      %p37 = scmp.eq.s32.totalorder %s21, 1
      %p38 = por %p36, %p37
      %p39 = scmp.ne.s32.totalorder %s31, %s34
      %p40 = scmp.eq.s32.totalorder %s21, 0
      %p41 = por %p39, %p40
      %p42 = scmp.ne.s32.totalorder %s31, %s34
      %p43 = scmp.eq.s32.totalorder %s26, 1
      %p44 = por %p42, %p43
      %p45 = scmp.ne.s32.totalorder %s34, %s35
      %p46 = scmp.eq.s32.totalorder %s26, 0
      %p47 = por %p45, %p46
      %p48 = scmp.ne.s32.totalorder %s34, %s35
      %p49 = scmp.eq.s32.totalorder %s27, 1
      %p50 = por %p48, %p49
      %p52 = scmp.ne.s32.totalorder %s35, %s51
      %p53 = scmp.eq.s32.totalorder %s27, 0
      %p54 = por %p52, %p53
      %s56 = sadd.s32 %s55, 1
      %p59 = scmp.eq.s32.totalorder %s21, 1
      %p60 = scmp.ne.s32.totalorder %s55, %s57
      %p61 = scmp.eq.s32.totalorder %s21, 0
      %p62 = por %p60, %p61
      %p63 = scmp.ne.s32.totalorder %s55, %s57
      %p64 = scmp.eq.s32.totalorder %s26, 1
      %p65 = por %p63, %p64
      %p66 = scmp.ne.s32.totalorder %s57, %s58
      %p67 = scmp.eq.s32.totalorder %s26, 0
      %p68 = por %p66, %p67
      %p69 = scmp.ne.s32.totalorder %s57, %s58
      %p70 = scmp.eq.s32.totalorder %s27, 1
      %p71 = por %p69, %p70
      %p73 = scmp.ne.s32.totalorder %s58, %s72
      %p74 = scmp.eq.s32.totalorder %s27, 0
      %p75 = por %p73, %p74
      %s77 = sadd.s32 %s76, 1
      %p80 = scmp.eq.s32.totalorder %s21, 1
      %p81 = scmp.ne.s32.totalorder %s76, %s78
      %p82 = scmp.eq.s32.totalorder %s21, 0
      %p83 = por %p81, %p82
      %p84 = scmp.ne.s32.totalorder %s76, %s78
      %p85 = scmp.eq.s32.totalorder %s26, 1
      %p86 = por %p84, %p85
      %p87 = scmp.ne.s32.totalorder %s78, %s79
      %p88 = scmp.eq.s32.totalorder %s26, 0
      %p89 = por %p87, %p88
      %p90 = scmp.ne.s32.totalorder %s78, %s79
      %p91 = scmp.eq.s32.totalorder %s27, 1
      %p92 = por %p90, %p91
      %p94 = scmp.ne.s32.totalorder %s79, %s93
      %p95 = scmp.eq.s32.totalorder %s27, 0
      %p96 = por %p94, %p95
      %s98 = sadd.s32 %s97, 1
      %p101 = scmp.eq.s32.totalorder %s21, 1
      %p102 = scmp.ne.s32.totalorder %s97, %s99
      %p103 = scmp.eq.s32.totalorder %s21, 0
      %p104 = por %p102, %p103
      %p105 = scmp.ne.s32.totalorder %s97, %s99
      %p106 = scmp.eq.s32.totalorder %s26, 1
      %p107 = por %p105, %p106
      %p108 = scmp.ne.s32.totalorder %s99, %s100
      %p109 = scmp.eq.s32.totalorder %s26, 0
      %p110 = por %p108, %p109
      %p111 = scmp.ne.s32.totalorder %s99, %s100
      %p112 = scmp.eq.s32.totalorder %s27, 1
      %p113 = por %p111, %p112
      %p115 = scmp.ne.s32.totalorder %s100, %s114
      %p116 = scmp.eq.s32.totalorder %s27, 0
      %p117 = por %p115, %p116
      %s119 = sadd.s32 %s118, 1
      %p122 = scmp.eq.s32.totalorder %s21, 1
      %p123 = scmp.ne.s32.totalorder %s118, %s120
      %p124 = scmp.eq.s32.totalorder %s21, 0
      %p125 = por %p123, %p124
      %p126 = scmp.ne.s32.totalorder %s118, %s120
      %p127 = scmp.eq.s32.totalorder %s26, 1
      %p128 = por %p126, %p127
      %p129 = scmp.ne.s32.totalorder %s120, %s121
      %p130 = scmp.eq.s32.totalorder %s26, 0
      %p131 = por %p129, %p130
      %p132 = scmp.ne.s32.totalorder %s120, %s121
      %p133 = scmp.eq.s32.totalorder %s27, 1
      %p134 = por %p132, %p133
      %p136 = scmp.ne.s32.totalorder %s121, %s135
      %p137 = scmp.eq.s32.totalorder %s27, 0
      %p138 = por %p136, %p137
      %s140 = sadd.s32 %s139, 1
      %p143 = scmp.eq.s32.totalorder %s21, 1
      %p144 = scmp.ne.s32.totalorder %s139, %s141
      %p145 = scmp.eq.s32.totalorder %s21, 0
      %p146 = por %p144, %p145
      %p147 = scmp.ne.s32.totalorder %s139, %s141
      %p148 = scmp.eq.s32.totalorder %s26, 1
      %p149 = por %p147, %p148
      %p150 = scmp.ne.s32.totalorder %s141, %s142
      %p151 = scmp.eq.s32.totalorder %s26, 0
      %p152 = por %p150, %p151
      %p153 = scmp.ne.s32.totalorder %s141, %s142
      %p154 = scmp.eq.s32.totalorder %s27, 1
      %p155 = por %p153, %p154
      %p157 = scmp.ne.s32.totalorder %s142, %s156
      %p158 = scmp.eq.s32.totalorder %s27, 0
      %p159 = por %p157, %p158
      %s160 = ssub.s32 %s21, %s28
      %p161 = scmp.eq.s32.totalorder %s160, 0
      %s163 = sadd.s32 %s162, 1
      %s164 = scalar_select %p161, %s162, %s163
      %p167 = pneg %p161
      %p168 = scmp.eq.s32.totalorder %s21, 1
      %p169 = por %p167, %p168
      %p170 = scmp.ne.s32.totalorder %s162, %s165
      %p171 = scmp.eq.s32.totalorder %s21, 0
      %p172 = por %p170, %p171
      %p173 = scmp.ne.s32.totalorder %s162, %s165
      %p174 = scmp.eq.s32.totalorder %s26, 1
      %p175 = por %p173, %p174
      %p176 = scmp.ne.s32.totalorder %s165, %s166
      %p177 = scmp.eq.s32.totalorder %s26, 0
      %p178 = por %p176, %p177
      %p179 = scmp.ne.s32.totalorder %s165, %s166
      %p180 = scmp.eq.s32.totalorder %s27, 1
      %p181 = por %p179, %p180
      %p183 = scmp.ne.s32.totalorder %s166, %s182
      %p184 = scmp.eq.s32.totalorder %s27, 0
      %p185 = por %p183, %p184
      %p186 = scmp.le.s32.totalorder 1, %s21
      %p187 = scmp.lt.s32.totalorder %s21, 3
      %p188 = pnand %p186, %p187
      %p189 = pneg %p188
      // Predicated region
      $region9: #{tpu_custom_call.1} parent=5 // pred_check
        _
      $region10: #{tpu_custom_call.1} parent=5 // pred_check_branch
        %191 = sbr.rel (%p188) target = $region12
      $region11: #{tpu_custom_call.1} parent=5 // pred_region
        %s192 = ssub.s32 %s21, 1
        // Predicated region
        $region13: #{tpu_custom_call.1} parent=11 // pred_check
          %p193 = pneg %p68
        $region14: #{tpu_custom_call.1} parent=11 // pred_check_branch
          %195 = sbr.rel (%p193) target = $region16
        $region15: #{tpu_custom_call.1} parent=11 // pred_region
          %s197 = ssub.s32 3072, 3072
          %198 = vsyncadd [#allocation6], %s197
          %s199 = sshll.u32 [#allocation5], 4
          %s200 = int_to_ptr.vmem [resolvable:$true] %s199
          %205 = dma.hbm_to_vmem [thread:$0]  %s1, 3072, %s200, [#allocation6], 256, 256, 16
        $region16: #{tpu_custom_call.1} parent=11 // pred_fallthru
          _
        // Predicated region
        $region17: #{tpu_custom_call.1} parent=11 // pred_check
          %p206 = pneg %p89
        $region18: #{tpu_custom_call.1} parent=11 // pred_check_branch
          %208 = sbr.rel (%p206) target = $region20
        $region19: #{tpu_custom_call.1} parent=11 // pred_region
          %s210 = ssub.s32 64, 64
          %211 = vsyncadd [#allocation6], %s210
          %s213 = sshll.u32 [#allocation7], 4
          %s214 = int_to_ptr.vmem [resolvable:$true] %s213
          %216 = dma.hbm_to_vmem [thread:$0]  %s2, 64, %s214, [#allocation6]
        $region20: #{tpu_custom_call.1} parent=11 // pred_fallthru
          _
        // Predicated region
        $region21: #{tpu_custom_call.1} parent=11 // pred_check
          %p217 = pneg %p110
        $region22: #{tpu_custom_call.1} parent=11 // pred_check_branch
          %219 = sbr.rel (%p217) target = $region24
        $region23: #{tpu_custom_call.1} parent=11 // pred_region
          %s221 = ssub.s32 256, 256
          %222 = vsyncadd [#allocation9], %s221
          %s223 = sshll.u32 [#allocation8], 4
          %s224 = int_to_ptr.vmem [resolvable:$true] %s223
          %229 = dma.hbm_to_vmem [thread:$0]  %s3, 256, %s224, [#allocation9], 128, 128, 8
        $region24: #{tpu_custom_call.1} parent=11 // pred_fallthru
          _
        // Predicated region
        $region25: #{tpu_custom_call.1} parent=11 // pred_check
          %p230 = pneg %p131
        $region26: #{tpu_custom_call.1} parent=11 // pred_check_branch
          %232 = sbr.rel (%p230) target = $region28
        $region27: #{tpu_custom_call.1} parent=11 // pred_region
          %s234 = ssub.s32 768, 768
          %235 = vsyncadd [#allocation9], %s234
          %s236 = sshll.u32 [#allocation10], 4
          %s237 = int_to_ptr.vmem [resolvable:$true] %s236
          %242 = dma.hbm_to_vmem [thread:$0]  %s4, 768, %s237, [#allocation9], 384, 384, 24
        $region28: #{tpu_custom_call.1} parent=11 // pred_fallthru
          _
        // Predicated region
        $region29: #{tpu_custom_call.1} parent=11 // pred_check
          %p243 = pneg %p152
        $region30: #{tpu_custom_call.1} parent=11 // pred_check_branch
          %245 = sbr.rel (%p243) target = $region32
        $region31: #{tpu_custom_call.1} parent=11 // pred_region
          %s247 = ssub.s32 3072, 3072
          %248 = vsyncadd [#allocation12], %s247
          %s249 = sshll.u32 [#allocation11], 4
          %s250 = int_to_ptr.vmem [resolvable:$true] %s249
          %255 = dma.hbm_to_vmem [thread:$0]  %s5, 3072, %s250, [#allocation12], 64, 64, 4
        $region32: #{tpu_custom_call.1} parent=11 // pred_fallthru
          _
      $region12: #{tpu_custom_call.1} parent=5 // pred_fallthru
        _
      %p256 = scmp.lt.s32.totalorder %s21, 2
      // Predicated region
      $region33: #{tpu_custom_call.1} parent=5 // pred_check
        %p257 = pneg %p256
      $region34: #{tpu_custom_call.1} parent=5 // pred_check_branch
        %259 = sbr.rel (%p257) target = $region36
      $region35: #{tpu_custom_call.1} parent=5 // pred_region
        // Predicated region
        $region37: #{tpu_custom_call.1} parent=35 // pred_check
          %p260 = pneg %p41
        $region38: #{tpu_custom_call.1} parent=35 // pred_check_branch
          %262 = sbr.rel (%p260) target = $region40
        $region39: #{tpu_custom_call.1} parent=35 // pred_region
          %s263 = sand.u32 %s31, 1
          %s264 = scalar_lea.sflag [#allocation3], %s263
          %s265 = sand.u32 %s31, 1
          %s266 = smul.addr %s265, 4
          %s267 = scalar_lea.vmem [#allocation2], %s266
          %s269 = ssub.s32 64, 64
          %270 = vsyncadd %s264, %s269
          %s271 = smul.addr %s21, 64
          %s272 = scalar_lea.hbm %s0, %s271
          %s274 = sshll.u32 %s267, 4
          %s275 = int_to_ptr.vmem [resolvable:$true] %s274
          %277 = dma.hbm_to_vmem [thread:$0]  %s272, 64, %s275, %s264
        $region40: #{tpu_custom_call.1} parent=35 // pred_fallthru
          _
      $region36: #{tpu_custom_call.1} parent=5 // pred_fallthru
        _
      %p278 = scmp.le.s32.totalorder 1, %s21
      %p279 = scmp.lt.s32.totalorder %s21, 3
      %p280 = pnand %p278, %p279
      %p281 = pneg %p280
      // Predicated region
      $region41: #{tpu_custom_call.1} parent=5 // pred_check
        _
      $region42: #{tpu_custom_call.1} parent=5 // pred_check_branch
        %283 = sbr.rel (%p280) target = $region44
      $region43: #{tpu_custom_call.1} parent=5 // pred_region
        %s284 = ssub.s32 %s21, 1
        %s285 = sand.u32 %s34, 1
        %s286 = scalar_lea.sflag [#allocation3], %s285
        %s287 = sand.u32 %s34, 1
        %s288 = smul.addr %s287, 4
        %s289 = scalar_lea.vmem [#allocation2], %s288
        // Predicated region
        $region45: #{tpu_custom_call.1} parent=43 // pred_check
          %p290 = pneg %p47
        $region46: #{tpu_custom_call.1} parent=43 // pred_check_branch
          %292 = sbr.rel (%p290) target = $region48
        $region47: #{tpu_custom_call.1} parent=43 // pred_region
          %293 = dma.done %s286, 64
        $region48: #{tpu_custom_call.1} parent=43 // pred_fallthru
          _
        // Predicated region
        $region49: #{tpu_custom_call.1} parent=43 // pred_check
          %p294 = pneg %p68
        $region50: #{tpu_custom_call.1} parent=43 // pred_check_branch
          %296 = sbr.rel (%p294) target = $region52
        $region51: #{tpu_custom_call.1} parent=43 // pred_region
          %297 = dma.done [#allocation6], 3072
        $region52: #{tpu_custom_call.1} parent=43 // pred_fallthru
          _
        // Predicated region
        $region53: #{tpu_custom_call.1} parent=43 // pred_check
          %p298 = pneg %p89
        $region54: #{tpu_custom_call.1} parent=43 // pred_check_branch
          %300 = sbr.rel (%p298) target = $region56
        $region55: #{tpu_custom_call.1} parent=43 // pred_region
          %301 = dma.done [#allocation6], 64
        $region56: #{tpu_custom_call.1} parent=43 // pred_fallthru
          _
        // Predicated region
        $region57: #{tpu_custom_call.1} parent=43 // pred_check
          %p302 = pneg %p110
        $region58: #{tpu_custom_call.1} parent=43 // pred_check_branch
          %304 = sbr.rel (%p302) target = $region60
        $region59: #{tpu_custom_call.1} parent=43 // pred_region
          %305 = dma.done [#allocation9], 256
        $region60: #{tpu_custom_call.1} parent=43 // pred_fallthru
          _
        // Predicated region
        $region61: #{tpu_custom_call.1} parent=43 // pred_check
          %p306 = pneg %p131
        $region62: #{tpu_custom_call.1} parent=43 // pred_check_branch
          %308 = sbr.rel (%p306) target = $region64
        $region63: #{tpu_custom_call.1} parent=43 // pred_region
          %309 = dma.done [#allocation9], 768
        $region64: #{tpu_custom_call.1} parent=43 // pred_fallthru
          _
        // Predicated region
        $region65: #{tpu_custom_call.1} parent=43 // pred_check
          %p310 = pneg %p152
        $region66: #{tpu_custom_call.1} parent=43 // pred_check_branch
          %312 = sbr.rel (%p310) target = $region68
        $region67: #{tpu_custom_call.1} parent=43 // pred_region
          %313 = dma.done [#allocation12], 3072
        $region68: #{tpu_custom_call.1} parent=43 // pred_fallthru
          _
        %s314 = sand.u32 %s34, 1
        %s315 = scalar_lea.sflag [#allocation3], %s314
        %s316 = sand.u32 %s34, 1
        %s317 = smul.addr %s316, 4
        %s318 = scalar_lea.vmem [#allocation2], %s317
        %p319 = pneg %p47
        %p320 = pneg %p44
        %p321 = pneg %p68
        %p322 = pneg %p65
        %p323 = pneg %p89
        %p324 = pneg %p86
        %p325 = pneg %p110
        %p326 = pneg %p107
        %p327 = pneg %p131
        %p328 = pneg %p128
        %p329 = pneg %p152
        %p330 = pneg %p149
        %p331 = pneg %p178
        %p332 = pneg %p175
        %s333 = sand.u32 %s165, 1
        %s334 = scalar_lea.sflag [#allocation4], %s333
        %s335 = sand.u32 %s165, 1
        %s336 = smul.addr %s335, 8
        %s337 = scalar_lea.vmem [#allocation13], %s336
        %v339 = vld [vmem:[%s289] sm:$0xf]
        %v340 = vld [vmem:[#allocation5] sm:$0xff]
        %v341 = vld [vmem:[#allocation5 + $0x8] sm:$0xff]
        %v342 = vld [vmem:[#allocation5 + $0x10] sm:$0xff]
        %v343 = vld [vmem:[#allocation5 + $0x18] sm:$0xff]
        %v344 = vld [vmem:[#allocation5 + $0x20] sm:$0xff]
        %v345 = vld [vmem:[#allocation5 + $0x28] sm:$0xff]
        %v346 = vld [vmem:[#allocation5 + $0x30] sm:$0xff]
        %v347 = vld [vmem:[#allocation5 + $0x38] sm:$0xff]
        %v348 = vld [vmem:[#allocation5 + $0x40] sm:$0xff]
        %v349 = vld [vmem:[#allocation5 + $0x48] sm:$0xff]
        %v350 = vld [vmem:[#allocation5 + $0x50] sm:$0xff]
        %v351 = vld [vmem:[#allocation5 + $0x58] sm:$0xff]
        %v352 = vld [vmem:[#allocation5 + $0x60] sm:$0xff]
        %v353 = vld [vmem:[#allocation5 + $0x68] sm:$0xff]
        %v354 = vld [vmem:[#allocation5 + $0x70] sm:$0xff]
        %v355 = vld [vmem:[#allocation5 + $0x78] sm:$0xff]
        %v356 = vld [vmem:[#allocation5 + $0x80] sm:$0xff]
        %v357 = vld [vmem:[#allocation5 + $0x88] sm:$0xff]
        %v358 = vld [vmem:[#allocation5 + $0x90] sm:$0xff]
        %v359 = vld [vmem:[#allocation5 + $0x98] sm:$0xff]
        %v360 = vld [vmem:[#allocation5 + $0xa0] sm:$0xff]
        %v361 = vld [vmem:[#allocation5 + $0xa8] sm:$0xff]
        %v362 = vld [vmem:[#allocation5 + $0xb0] sm:$0xff]
        %v363 = vld [vmem:[#allocation5 + $0xb8] sm:$0xff]
        %v364 = vld [vmem:[#allocation7] sm:$0xf]
        %v366 = vlaneseq
        %v367 = vshrl.u32 %v366, 7
        %v368 = vsub.s32 0, %v367
        %v369 = vrot.slane %v364, %v368
        %v370 = vlaneseq
        %v371 = vshrl.u32 %v370, 7
        %v372 = vsub.s32 1, %v371
        %v373 = vrot.slane %v364, %v372
        %v374 = vlaneseq
        %v375 = vshrl.u32 %v374, 7
        %v376 = vsub.s32 2, %v375
        %v377 = vrot.slane %v364, %v376
        %v378 = vlaneseq
        %v379 = vshrl.u32 %v378, 7
        %v380 = vsub.s32 3, %v379
        %v381 = vrot.slane %v364, %v380
        %v410 = vunpack.c.l.b16 %v340
        %v411 = vunpack.c.h.b16 %v340
        %v412 = vunpack.c.l.b16 %v341
        %v413 = vunpack.c.h.b16 %v341
        %v414 = vunpack.c.l.b16 %v342
        %v415 = vunpack.c.h.b16 %v342
        %v416 = vunpack.c.l.b16 %v343
        %v417 = vunpack.c.h.b16 %v343
        %v418 = vunpack.c.l.b16 %v344
        %v419 = vunpack.c.h.b16 %v344
        %v420 = vunpack.c.l.b16 %v345
        %v421 = vunpack.c.h.b16 %v345
        %v422 = vunpack.c.l.b16 %v346
        %v423 = vunpack.c.h.b16 %v346
        %v424 = vunpack.c.l.b16 %v347
        %v425 = vunpack.c.h.b16 %v347
        %v426 = vunpack.c.l.b16 %v348
        %v427 = vunpack.c.h.b16 %v348
        %v428 = vunpack.c.l.b16 %v349
        %v429 = vunpack.c.h.b16 %v349
        %v430 = vunpack.c.l.b16 %v350
        %v431 = vunpack.c.h.b16 %v350
        %v432 = vunpack.c.l.b16 %v351
        %v433 = vunpack.c.h.b16 %v351
        %v434 = vunpack.c.l.b16 %v352
        %v435 = vunpack.c.h.b16 %v352
        %v436 = vunpack.c.l.b16 %v353
        %v437 = vunpack.c.h.b16 %v353
        %v438 = vunpack.c.l.b16 %v354
        %v439 = vunpack.c.h.b16 %v354
        %v440 = vunpack.c.l.b16 %v355
        %v441 = vunpack.c.h.b16 %v355
        %v442 = vunpack.c.l.b16 %v356
        %v443 = vunpack.c.h.b16 %v356
        %v444 = vunpack.c.l.b16 %v357
        %v445 = vunpack.c.h.b16 %v357
        %v446 = vunpack.c.l.b16 %v358
        %v447 = vunpack.c.h.b16 %v358
        %v448 = vunpack.c.l.b16 %v359
        %v449 = vunpack.c.h.b16 %v359
        %v450 = vunpack.c.l.b16 %v360
        %v451 = vunpack.c.h.b16 %v360
        %v452 = vunpack.c.l.b16 %v361
        %v453 = vunpack.c.h.b16 %v361
        %v454 = vunpack.c.l.b16 %v362
        %v455 = vunpack.c.h.b16 %v362
        %v456 = vunpack.c.l.b16 %v363
        %v457 = vunpack.c.h.b16 %v363
        %v458 = vpack.c.b16 %v414, %v410
        %v459 = vpack.c.b16 %v415, %v411
        %v460 = vpack.c.b16 %v416, %v412
        %v461 = vpack.c.b16 %v417, %v413
        %v462 = vpack.c.b16 %v422, %v418
        %v463 = vpack.c.b16 %v423, %v419
        %v464 = vpack.c.b16 %v424, %v420
        %v465 = vpack.c.b16 %v425, %v421
        %v466 = vpack.c.b16 %v430, %v426
        %v467 = vpack.c.b16 %v431, %v427
        %v468 = vpack.c.b16 %v432, %v428
        %v469 = vpack.c.b16 %v433, %v429
        %v470 = vpack.c.b16 %v438, %v434
        %v471 = vpack.c.b16 %v439, %v435
        %v472 = vpack.c.b16 %v440, %v436
        %v473 = vpack.c.b16 %v441, %v437
        %v474 = vpack.c.b16 %v446, %v442
        %v475 = vpack.c.b16 %v447, %v443
        %v476 = vpack.c.b16 %v448, %v444
        %v477 = vpack.c.b16 %v449, %v445
        %v478 = vpack.c.b16 %v454, %v450
        %v479 = vpack.c.b16 %v455, %v451
        %v480 = vpack.c.b16 %v456, %v452
        %v481 = vpack.c.b16 %v457, %v453
        %vm506 = vcmask 785408
        %v508 = vsel %vm506, %v339, 0
        %510 = vmatprep.subr.bf16.mxu0 %v459
        %511 = vmatpush1.bf16.msra.mxu0 %v458
        %512 = vmatprep.subr.bf16.mxu0 %v463
        %513 = vmatpush1.bf16.msra.mxu0 %v462
        %514 = vmatprep.subr.bf16.mxu0 %v467
        %515 = vmatpush1.bf16.msra.mxu0 %v466
        %516 = vmatprep.subr.bf16.mxu0 %v471
        %517 = vmatpush1.bf16.msra.mxu0 %v470
        %518 = vmatprep.subr.bf16.mxu0 %v475
        %519 = vmatpush1.bf16.msra.mxu0 %v474
        %520 = vmatprep.subr.bf16.mxu0 %v479
        %521 = vmatpush1.bf16.msra.mxu0 %v478
        %522 = vmatprep.subr.bf16.mxu0 0
        %523 = vmatpush1.bf16.msra.mxu0 0
        %524 = vmatprep.subr.bf16.mxu0 0
        %525 = vmatpush1.bf16.msra.mxu0 0
        %526 = vmatprep.subr.bf16.mxu0 0
        %527 = vmatpush1.bf16.msra.mxu0 0
        %528 = vmatprep.subr.bf16.mxu0 0
        %529 = vmatpush1.bf16.msra.mxu0 0
        %530 = vmatprep.subr.bf16.mxu0 0
        %531 = vmatpush1.bf16.msra.mxu0 0
        %532 = vmatprep.subr.bf16.mxu0 0
        %533 = vmatpush1.bf16.msra.mxu0 0
        %534 = vmatprep.subr.bf16.mxu0 0
        %535 = vmatpush1.bf16.msra.mxu0 0
        %536 = vmatprep.subr.bf16.mxu0 0
        %537 = vmatpush1.bf16.msra.mxu0 0
        %538 = vmatprep.subr.bf16.mxu0 0
        %539 = vmatpush1.bf16.msra.mxu0 0
        %540 = vmatprep.subr.bf16.mxu0 0
        %541 = vmatpush1.bf16.msra.mxu0 0
        %542 = vmatprep.mubr.bf16.mxu0 0
        %543 = vmatmul.mubr.bf16.gmra.mrb[0].mxu0 %v508
        %v544 = vpop.f32.mrb[0].mxu0
        %v545 = vadd.f32 %v369, %v544
        %v546 = vpop.f32.mrb[0].mxu0
        %v547 = vadd.f32 %v373, %v546
        %v548 = vpop.f32.mrb[0].mxu0
        %v549 = vpop.f32.mrb[0].mxu0
        %550 = vdwg.mxu0
        %551 = vmatprep.subr.bf16.mxu0 %v461
        %552 = vmatpush1.bf16.msra.mxu0 %v460
        %553 = vmatprep.subr.bf16.mxu0 %v465
        %554 = vmatpush1.bf16.msra.mxu0 %v464
        %555 = vmatprep.subr.bf16.mxu0 %v469
        %556 = vmatpush1.bf16.msra.mxu0 %v468
        %557 = vmatprep.subr.bf16.mxu0 %v473
        %558 = vmatpush1.bf16.msra.mxu0 %v472
        %559 = vmatprep.subr.bf16.mxu0 %v477
        %560 = vmatpush1.bf16.msra.mxu0 %v476
        %561 = vmatprep.subr.bf16.mxu0 %v481
        %562 = vmatpush1.bf16.msra.mxu0 %v480
        %563 = vmatprep.subr.bf16.mxu0 0
        %564 = vmatpush1.bf16.msra.mxu0 0
        %565 = vmatprep.subr.bf16.mxu0 0
        %566 = vmatpush1.bf16.msra.mxu0 0
        %567 = vmatprep.subr.bf16.mxu0 0
        %568 = vmatpush1.bf16.msra.mxu0 0
        %569 = vmatprep.subr.bf16.mxu0 0
        %570 = vmatpush1.bf16.msra.mxu0 0
        %571 = vmatprep.subr.bf16.mxu0 0
        %572 = vmatpush1.bf16.msra.mxu0 0
        %573 = vmatprep.subr.bf16.mxu0 0
        %574 = vmatpush1.bf16.msra.mxu0 0
        %575 = vmatprep.subr.bf16.mxu0 0
        %576 = vmatpush1.bf16.msra.mxu0 0
        %577 = vmatprep.subr.bf16.mxu0 0
        %578 = vmatpush1.bf16.msra.mxu0 0
        %579 = vmatprep.subr.bf16.mxu0 0
        %580 = vmatpush1.bf16.msra.mxu0 0
        %581 = vmatprep.subr.bf16.mxu0 0
        %582 = vmatpush1.bf16.msra.mxu0 0
        %583 = vmatprep.mubr.bf16.mxu0 0
        %584 = vmatmul.mubr.bf16.gmra.mrb[0].mxu0 %v508
        %v585 = vpop.f32.mrb[0].mxu0
        %v586 = vadd.f32 %v377, %v585
        %v587 = vpop.f32.mrb[0].mxu0
        %v588 = vadd.f32 %v381, %v587
        %v589 = vpop.f32.mrb[0].mxu0
        %v590 = vpop.f32.mrb[0].mxu0
        %591 = vdwg.mxu0
        %vm592 = vcmask 97280
        %v593 = vsel %vm592, %v588, -inf
        %594 = vmax.xlane.f32.xlu0 %v593
        %v595 = vpop.xlane.xlu0 %594
        %v596 = vsub.f32 %v588, %v595
        %v597 = vmul.f32 %v596, 1.442695
        %v598 = vpow.pop %v597
        %v599 = vld [vmem:[#allocation8] sm:$0xff]
        %v600 = vld [vmem:[#allocation8 + $0x8] sm:$0xf]
        %v602 = vsel %vm592, %v598, 0
        %vm604 = vcmask 1043456
        %v606 = vsel %vm604, %v600, 0
        %608 = vmatprep.subr.mxu0 0.0
        %609 = vmatpush1.msra.mxu0 %v599
        %610 = vmatprep.subr.mxu0 0.0
        %611 = vmatpush1.msra.mxu0 %v606
        %612 = vmatprep.subr.mxu0 0.0
        %613 = vmatpush1.msra.mxu0 0.0
        %614 = vmatprep.subr.mxu0 0.0
        %615 = vmatpush1.msra.mxu0 0.0
        %616 = vmatprep.subr.mxu0 0.0
        %617 = vmatpush1.msra.mxu0 0.0
        %618 = vmatprep.subr.mxu0 0.0
        %619 = vmatpush1.msra.mxu0 0.0
        %620 = vmatprep.subr.mxu0 0.0
        %621 = vmatpush1.msra.mxu0 0.0
        %622 = vmatprep.subr.mxu0 0.0
        %623 = vmatpush1.msra.mxu0 0.0
        %624 = vmatprep.subr.mxu0 0.0
        %625 = vmatpush1.msra.mxu0 0.0
        %626 = vmatprep.subr.mxu0 0.0
        %627 = vmatpush1.msra.mxu0 0.0
        %628 = vmatprep.subr.mxu0 0.0
        %629 = vmatpush1.msra.mxu0 0.0
        %630 = vmatprep.subr.mxu0 0.0
        %631 = vmatpush1.msra.mxu0 0.0
        %632 = vmatprep.subr.mxu0 0.0
        %633 = vmatpush1.msra.mxu0 0.0
        %634 = vmatprep.subr.mxu0 0.0
        %635 = vmatpush1.msra.mxu0 0.0
        %636 = vmatprep.subr.mxu0 0.0
        %637 = vmatpush1.msra.mxu0 0.0
        %638 = vmatprep.subr.mxu0 0.0
        %639 = vmatpush1.msra.mxu0 0.0
        %640 = vmatprep.subr.mxu0 0.0
        %641 = vmatpush1.msra.mxu0 0.0
        %642 = vmatprep.subr.mxu0 0.0
        %643 = vmatpush1.msra.mxu0 0.0
        %644 = vmatprep.subr.mxu0 0.0
        %645 = vmatpush1.msra.mxu0 0.0
        %646 = vmatprep.subr.mxu0 0.0
        %647 = vmatpush1.msra.mxu0 0.0
        %648 = vmatprep.subr.mxu0 0.0
        %649 = vmatpush1.msra.mxu0 0.0
        %650 = vmatprep.subr.mxu0 0.0
        %651 = vmatpush1.msra.mxu0 0.0
        %652 = vmatprep.subr.mxu0 0.0
        %653 = vmatpush1.msra.mxu0 0.0
        %654 = vmatprep.subr.mxu0 0.0
        %655 = vmatpush1.msra.mxu0 0.0
        %656 = vmatprep.subr.mxu0 0.0
        %657 = vmatpush1.msra.mxu0 0.0
        %658 = vmatprep.subr.mxu0 0.0
        %659 = vmatpush1.msra.mxu0 0.0
        %660 = vmatprep.subr.mxu0 0.0
        %661 = vmatpush1.msra.mxu0 0.0
        %662 = vmatprep.subr.mxu0 0.0
        %663 = vmatpush1.msra.mxu0 0.0
        %664 = vmatprep.subr.mxu0 0.0
        %665 = vmatpush1.msra.mxu0 0.0
        %666 = vmatprep.subr.mxu0 0.0
        %667 = vmatpush1.msra.mxu0 0.0
        %668 = vmatprep.subr.mxu0 0.0
        %669 = vmatpush1.msra.mxu0 0.0
        %670 = vmatprep.subr.mxu0 0.0
        %671 = vmatpush1.msra.mxu0 0.0
        %672 = vmatprep.mubr.f32.mxu0 0.0
        %673 = vmatmul.mubr.f32.gmra.mrb[0].mxu0 %v602
        %v674 = vpop.f32.mrb[0].mxu0
        %v675 = vadd.f32 0.0, %v674
        %v676 = vpop.f32.mrb[0].mxu0
        %677 = vdwg.mxu0
        %v678 = vrcp.pop %v675
        %v679 = vmul.f32 %v598, %v678
        %v680 = vld [vmem:[#allocation10] sm:$0xff]
        %v681 = vld [vmem:[#allocation10 + $0x8] sm:$0xff]
        %v682 = vld [vmem:[#allocation10 + $0x10] sm:$0xff]
        %v683 = vld [vmem:[#allocation10 + $0x18] sm:$0xf]
        %v684 = vld [vmem:[#allocation10 + $0x20] sm:$0xf]
        %v685 = vld [vmem:[#allocation10 + $0x28] sm:$0xf]
        %v687 = vsel %vm592, %v679, 0
        %v690 = vsel %vm604, %v683, 0
        %v693 = vsel %vm604, %v684, 0
        %v696 = vsel %vm604, %v685, 0
        %698 = vmatprep.subr.mxu0 %v681
        %699 = vmatpush1.msra.mxu0 %v680
        %700 = vmatprep.subr.mxu0 %v693
        %701 = vmatpush1.msra.mxu0 %v690
        %702 = vmatprep.subr.mxu0 0.0
        %703 = vmatpush1.msra.mxu0 0.0
        %704 = vmatprep.subr.mxu0 0.0
        %705 = vmatpush1.msra.mxu0 0.0
        %706 = vmatprep.subr.mxu0 0.0
        %707 = vmatpush1.msra.mxu0 0.0
        %708 = vmatprep.subr.mxu0 0.0
        %709 = vmatpush1.msra.mxu0 0.0
        %710 = vmatprep.subr.mxu0 0.0
        %711 = vmatpush1.msra.mxu0 0.0
        %712 = vmatprep.subr.mxu0 0.0
        %713 = vmatpush1.msra.mxu0 0.0
        %714 = vmatprep.subr.mxu0 0.0
        %715 = vmatpush1.msra.mxu0 0.0
        %716 = vmatprep.subr.mxu0 0.0
        %717 = vmatpush1.msra.mxu0 0.0
        %718 = vmatprep.subr.mxu0 0.0
        %719 = vmatpush1.msra.mxu0 0.0
        %720 = vmatprep.subr.mxu0 0.0
        %721 = vmatpush1.msra.mxu0 0.0
        %722 = vmatprep.subr.mxu0 0.0
        %723 = vmatpush1.msra.mxu0 0.0
        %724 = vmatprep.subr.mxu0 0.0
        %725 = vmatpush1.msra.mxu0 0.0
        %726 = vmatprep.subr.mxu0 0.0
        %727 = vmatpush1.msra.mxu0 0.0
        %728 = vmatprep.subr.mxu0 0.0
        %729 = vmatpush1.msra.mxu0 0.0
        %730 = vmatprep.subr.mxu0 0.0
        %731 = vmatpush1.msra.mxu0 0.0
        %732 = vmatprep.subr.mxu0 0.0
        %733 = vmatpush1.msra.mxu0 0.0
        %734 = vmatprep.subr.mxu0 0.0
        %735 = vmatpush1.msra.mxu0 0.0
        %736 = vmatprep.subr.mxu0 0.0
        %737 = vmatpush1.msra.mxu0 0.0
        %738 = vmatprep.subr.mxu0 0.0
        %739 = vmatpush1.msra.mxu0 0.0
        %740 = vmatprep.subr.mxu0 0.0
        %741 = vmatpush1.msra.mxu0 0.0
        %742 = vmatprep.subr.mxu0 0.0
        %743 = vmatpush1.msra.mxu0 0.0
        %744 = vmatprep.subr.mxu0 0.0
        %745 = vmatpush1.msra.mxu0 0.0
        %746 = vmatprep.subr.mxu0 0.0
        %747 = vmatpush1.msra.mxu0 0.0
        %748 = vmatprep.subr.mxu0 0.0
        %749 = vmatpush1.msra.mxu0 0.0
        %750 = vmatprep.subr.mxu0 0.0
        %751 = vmatpush1.msra.mxu0 0.0
        %752 = vmatprep.subr.mxu0 0.0
        %753 = vmatpush1.msra.mxu0 0.0
        %754 = vmatprep.subr.mxu0 0.0
        %755 = vmatpush1.msra.mxu0 0.0
        %756 = vmatprep.subr.mxu0 0.0
        %757 = vmatpush1.msra.mxu0 0.0
        %758 = vmatprep.subr.mxu0 0.0
        %759 = vmatpush1.msra.mxu0 0.0
        %760 = vmatprep.subr.mxu0 0.0
        %761 = vmatpush1.msra.mxu0 0.0
        %762 = vmatprep.mubr.f32.mxu0 0.0
        %763 = vmatmul.mubr.f32.gmra.mrb[0].mxu0 %v687
        %v764 = vpop.f32.mrb[0].mxu0
        %v765 = vadd.f32 0.0, %v764
        %v766 = vpop.f32.mrb[0].mxu0
        %v767 = vadd.f32 0.0, %v766
        %768 = vdwg.mxu0
        %769 = vmatprep.subr.mxu0 0.0
        %770 = vmatpush1.msra.mxu0 %v682
        %771 = vmatprep.subr.mxu0 0.0
        %772 = vmatpush1.msra.mxu0 %v696
        %773 = vmatprep.subr.mxu0 0.0
        %774 = vmatpush1.msra.mxu0 0.0
        %775 = vmatprep.subr.mxu0 0.0
        %776 = vmatpush1.msra.mxu0 0.0
        %777 = vmatprep.subr.mxu0 0.0
        %778 = vmatpush1.msra.mxu0 0.0
        %779 = vmatprep.subr.mxu0 0.0
        %780 = vmatpush1.msra.mxu0 0.0
        %781 = vmatprep.subr.mxu0 0.0
        %782 = vmatpush1.msra.mxu0 0.0
        %783 = vmatprep.subr.mxu0 0.0
        %784 = vmatpush1.msra.mxu0 0.0
        %785 = vmatprep.subr.mxu0 0.0
        %786 = vmatpush1.msra.mxu0 0.0
        %787 = vmatprep.subr.mxu0 0.0
        %788 = vmatpush1.msra.mxu0 0.0
        %789 = vmatprep.subr.mxu0 0.0
        %790 = vmatpush1.msra.mxu0 0.0
        %791 = vmatprep.subr.mxu0 0.0
        %792 = vmatpush1.msra.mxu0 0.0
        %793 = vmatprep.subr.mxu0 0.0
        %794 = vmatpush1.msra.mxu0 0.0
        %795 = vmatprep.subr.mxu0 0.0
        %796 = vmatpush1.msra.mxu0 0.0
        %797 = vmatprep.subr.mxu0 0.0
        %798 = vmatpush1.msra.mxu0 0.0
        %799 = vmatprep.subr.mxu0 0.0
        %800 = vmatpush1.msra.mxu0 0.0
        %801 = vmatprep.subr.mxu0 0.0
        %802 = vmatpush1.msra.mxu0 0.0
        %803 = vmatprep.subr.mxu0 0.0
        %804 = vmatpush1.msra.mxu0 0.0
        %805 = vmatprep.subr.mxu0 0.0
        %806 = vmatpush1.msra.mxu0 0.0
        %807 = vmatprep.subr.mxu0 0.0
        %808 = vmatpush1.msra.mxu0 0.0
        %809 = vmatprep.subr.mxu0 0.0
        %810 = vmatpush1.msra.mxu0 0.0
        %811 = vmatprep.subr.mxu0 0.0
        %812 = vmatpush1.msra.mxu0 0.0
        %813 = vmatprep.subr.mxu0 0.0
        %814 = vmatpush1.msra.mxu0 0.0
        %815 = vmatprep.subr.mxu0 0.0
        %816 = vmatpush1.msra.mxu0 0.0
        %817 = vmatprep.subr.mxu0 0.0
        %818 = vmatpush1.msra.mxu0 0.0
        %819 = vmatprep.subr.mxu0 0.0
        %820 = vmatpush1.msra.mxu0 0.0
        %821 = vmatprep.subr.mxu0 0.0
        %822 = vmatpush1.msra.mxu0 0.0
        %823 = vmatprep.subr.mxu0 0.0
        %824 = vmatpush1.msra.mxu0 0.0
        %825 = vmatprep.subr.mxu0 0.0
        %826 = vmatpush1.msra.mxu0 0.0
        %827 = vmatprep.subr.mxu0 0.0
        %828 = vmatpush1.msra.mxu0 0.0
        %829 = vmatprep.subr.mxu0 0.0
        %830 = vmatpush1.msra.mxu0 0.0
        %831 = vmatprep.subr.mxu0 0.0
        %832 = vmatpush1.msra.mxu0 0.0
        %833 = vmatprep.mubr.f32.mxu0 0.0
        %834 = vmatmul.mubr.f32.gmra.mrb[0].mxu0 %v687
        %v835 = vpop.f32.mrb[0].mxu0
        %v836 = vadd.f32 0.0, %v835
        %v837 = vpop.f32.mrb[0].mxu0
        %838 = vdwg.mxu0
        %v839 = vmul.f32 %v545, %v765
        %v840 = vmul.f32 %v547, %v767
        %v841 = vmul.f32 %v586, %v836
        %v842 = vpack.c.bf16 %v839, %v839
        %v843 = vpack.c.bf16 %v840, %v840
        %v844 = vpack.c.bf16 %v841, %v841
        %v845 = vld [vmem:[#allocation11] sm:$0xf]
        %v846 = vld [vmem:[#allocation11 + $0x4] sm:$0xf]
        %v847 = vld [vmem:[#allocation11 + $0x8] sm:$0xf]
        %v848 = vld [vmem:[#allocation11 + $0xc] sm:$0xf]
        %v849 = vld [vmem:[#allocation11 + $0x10] sm:$0xf]
        %v850 = vld [vmem:[#allocation11 + $0x14] sm:$0xf]
        %v851 = vld [vmem:[#allocation11 + $0x18] sm:$0xf]
        %v852 = vld [vmem:[#allocation11 + $0x1c] sm:$0xf]
        %v853 = vld [vmem:[#allocation11 + $0x20] sm:$0xf]
        %v854 = vld [vmem:[#allocation11 + $0x24] sm:$0xf]
        %v855 = vld [vmem:[#allocation11 + $0x28] sm:$0xf]
        %v856 = vld [vmem:[#allocation11 + $0x2c] sm:$0xf]
        %v857 = vld [vmem:[#allocation11 + $0x30] sm:$0xf]
        %v858 = vld [vmem:[#allocation11 + $0x34] sm:$0xf]
        %v859 = vld [vmem:[#allocation11 + $0x38] sm:$0xf]
        %v860 = vld [vmem:[#allocation11 + $0x3c] sm:$0xf]
        %v861 = vld [vmem:[#allocation11 + $0x40] sm:$0xf]
        %v862 = vld [vmem:[#allocation11 + $0x44] sm:$0xf]
        %v863 = vld [vmem:[#allocation11 + $0x48] sm:$0xf]
        %v864 = vld [vmem:[#allocation11 + $0x4c] sm:$0xf]
        %v865 = vld [vmem:[#allocation11 + $0x50] sm:$0xf]
        %v866 = vld [vmem:[#allocation11 + $0x54] sm:$0xf]
        %v867 = vld [vmem:[#allocation11 + $0x58] sm:$0xf]
        %v868 = vld [vmem:[#allocation11 + $0x5c] sm:$0xf]
        %v869 = vld [vmem:[#allocation11 + $0x60] sm:$0xf]
        %v870 = vld [vmem:[#allocation11 + $0x64] sm:$0xf]
        %v871 = vld [vmem:[#allocation11 + $0x68] sm:$0xf]
        %v872 = vld [vmem:[#allocation11 + $0x6c] sm:$0xf]
        %v873 = vld [vmem:[#allocation11 + $0x70] sm:$0xf]
        %v874 = vld [vmem:[#allocation11 + $0x74] sm:$0xf]
        %v875 = vld [vmem:[#allocation11 + $0x78] sm:$0xf]
        %v876 = vld [vmem:[#allocation11 + $0x7c] sm:$0xf]
        %v877 = vld [vmem:[#allocation11 + $0x80] sm:$0xf]
        %v878 = vld [vmem:[#allocation11 + $0x84] sm:$0xf]
        %v879 = vld [vmem:[#allocation11 + $0x88] sm:$0xf]
        %v880 = vld [vmem:[#allocation11 + $0x8c] sm:$0xf]
        %v881 = vld [vmem:[#allocation11 + $0x90] sm:$0xf]
        %v882 = vld [vmem:[#allocation11 + $0x94] sm:$0xf]
        %v883 = vld [vmem:[#allocation11 + $0x98] sm:$0xf]
        %v884 = vld [vmem:[#allocation11 + $0x9c] sm:$0xf]
        %v885 = vld [vmem:[#allocation11 + $0xa0] sm:$0xf]
        %v886 = vld [vmem:[#allocation11 + $0xa4] sm:$0xf]
        %v887 = vld [vmem:[#allocation11 + $0xa8] sm:$0xf]
        %v888 = vld [vmem:[#allocation11 + $0xac] sm:$0xf]
        %v889 = vld [vmem:[#allocation11 + $0xb0] sm:$0xf]
        %v890 = vld [vmem:[#allocation11 + $0xb4] sm:$0xf]
        %v891 = vld [vmem:[#allocation11 + $0xb8] sm:$0xf]
        %v892 = vld [vmem:[#allocation11 + $0xbc] sm:$0xf]
        %v941 = vunpack.c.l.b16 %v845
        %v942 = vunpack.c.l.b16 %v846
        %v943 = vunpack.c.l.b16 %v847
        %v944 = vunpack.c.l.b16 %v848
        %v945 = vunpack.c.l.b16 %v849
        %v946 = vunpack.c.l.b16 %v850
        %v947 = vunpack.c.l.b16 %v851
        %v948 = vunpack.c.l.b16 %v852
        %v949 = vunpack.c.l.b16 %v853
        %v950 = vunpack.c.l.b16 %v854
        %v951 = vunpack.c.l.b16 %v855
        %v952 = vunpack.c.l.b16 %v856
        %v953 = vunpack.c.l.b16 %v857
        %v954 = vunpack.c.l.b16 %v858
        %v955 = vunpack.c.l.b16 %v859
        %v956 = vunpack.c.l.b16 %v860
        %v957 = vunpack.c.l.b16 %v861
        %v958 = vunpack.c.l.b16 %v862
        %v959 = vunpack.c.l.b16 %v863
        %v960 = vunpack.c.l.b16 %v864
        %v961 = vunpack.c.l.b16 %v865
        %v962 = vunpack.c.l.b16 %v866
        %v963 = vunpack.c.l.b16 %v867
        %v964 = vunpack.c.l.b16 %v868
        %v965 = vunpack.c.l.b16 %v869
        %v966 = vunpack.c.l.b16 %v870
        %v967 = vunpack.c.l.b16 %v871
        %v968 = vunpack.c.l.b16 %v872
        %v969 = vunpack.c.l.b16 %v873
        %v970 = vunpack.c.l.b16 %v874
        %v971 = vunpack.c.l.b16 %v875
        %v972 = vunpack.c.l.b16 %v876
        %v973 = vunpack.c.l.b16 %v877
        %v974 = vunpack.c.l.b16 %v878
        %v975 = vunpack.c.l.b16 %v879
        %v976 = vunpack.c.l.b16 %v880
        %v977 = vunpack.c.l.b16 %v881
        %v978 = vunpack.c.l.b16 %v882
        %v979 = vunpack.c.l.b16 %v883
        %v980 = vunpack.c.l.b16 %v884
        %v981 = vunpack.c.l.b16 %v885
        %v982 = vunpack.c.l.b16 %v886
        %v983 = vunpack.c.l.b16 %v887
        %v984 = vunpack.c.l.b16 %v888
        %v985 = vunpack.c.l.b16 %v889
        %v986 = vunpack.c.l.b16 %v890
        %v987 = vunpack.c.l.b16 %v891
        %v988 = vunpack.c.l.b16 %v892
        %v989 = vpack.c.b16 %v942, %v941
        %v990 = vpack.c.b16 %v944, %v943
        %v991 = vpack.c.b16 %v946, %v945
        %v992 = vpack.c.b16 %v948, %v947
        %v993 = vpack.c.b16 %v950, %v949
        %v994 = vpack.c.b16 %v952, %v951
        %v995 = vpack.c.b16 %v954, %v953
        %v996 = vpack.c.b16 %v956, %v955
        %v997 = vpack.c.b16 %v958, %v957
        %v998 = vpack.c.b16 %v960, %v959
        %v999 = vpack.c.b16 %v962, %v961
        %v1000 = vpack.c.b16 %v964, %v963
        %v1001 = vpack.c.b16 %v966, %v965
        %v1002 = vpack.c.b16 %v968, %v967
        %v1003 = vpack.c.b16 %v970, %v969
        %v1004 = vpack.c.b16 %v972, %v971
        %v1005 = vpack.c.b16 %v974, %v973
        %v1006 = vpack.c.b16 %v976, %v975
        %v1007 = vpack.c.b16 %v978, %v977
        %v1008 = vpack.c.b16 %v980, %v979
        %v1009 = vpack.c.b16 %v982, %v981
        %v1010 = vpack.c.b16 %v984, %v983
        %v1011 = vpack.c.b16 %v986, %v985
        %v1012 = vpack.c.b16 %v988, %v987
        %1037 = vmatprep.subr.bf16.mxu0 0
        %1038 = vmatpush1.bf16.msra.mxu0 %v989
        %1039 = vmatprep.subr.bf16.mxu0 0
        %1040 = vmatpush1.bf16.msra.mxu0 %v990
        %1041 = vmatprep.subr.bf16.mxu0 0
        %1042 = vmatpush1.bf16.msra.mxu0 %v991
        %1043 = vmatprep.subr.bf16.mxu0 0
        %1044 = vmatpush1.bf16.msra.mxu0 %v992
        %1045 = vmatprep.subr.bf16.mxu0 0
        %1046 = vmatpush1.bf16.msra.mxu0 %v993
        %1047 = vmatprep.subr.bf16.mxu0 0
        %1048 = vmatpush1.bf16.msra.mxu0 %v994
        %1049 = vmatprep.subr.bf16.mxu0 0
        %1050 = vmatpush1.bf16.msra.mxu0 %v995
        %1051 = vmatprep.subr.bf16.mxu0 0
        %1052 = vmatpush1.bf16.msra.mxu0 %v996
        %1053 = vmatprep.subr.bf16.mxu0 0
        %1054 = vmatpush1.bf16.msra.mxu0 %v997
        %1055 = vmatprep.subr.bf16.mxu0 0
        %1056 = vmatpush1.bf16.msra.mxu0 %v998
        %1057 = vmatprep.subr.bf16.mxu0 0
        %1058 = vmatpush1.bf16.msra.mxu0 %v999
        %1059 = vmatprep.subr.bf16.mxu0 0
        %1060 = vmatpush1.bf16.msra.mxu0 %v1000
        %1061 = vmatprep.subr.bf16.mxu0 0
        %1062 = vmatpush1.bf16.msra.mxu0 %v1001
        %1063 = vmatprep.subr.bf16.mxu0 0
        %1064 = vmatpush1.bf16.msra.mxu0 %v1002
        %1065 = vmatprep.subr.bf16.mxu0 0
        %1066 = vmatpush1.bf16.msra.mxu0 %v1003
        %1067 = vmatprep.subr.bf16.mxu0 0
        %1068 = vmatpush1.bf16.msra.mxu0 %v1004
        %1069 = vmatprep.mubr.bf16.mxu0 %v843
        %1070 = vmatmul.mubr.bf16.gmra.mrb[0].mxu0 %v842
        %v1071 = vpop.f32.mrb[0].mxu0
        %v1072 = vadd.f32 0.0, %v1071
        %v1073 = vpop.f32.mrb[0].mxu0
        %v1074 = vpop.f32.mrb[0].mxu0
        %v1075 = vpop.f32.mrb[0].mxu0
        %1076 = vdwg.mxu0
        %1077 = vmatprep.subr.bf16.mxu0 0
        %1078 = vmatpush1.bf16.msra.mxu0 %v1005
        %1079 = vmatprep.subr.bf16.mxu0 0
        %1080 = vmatpush1.bf16.msra.mxu0 %v1006
        %1081 = vmatprep.subr.bf16.mxu0 0
        %1082 = vmatpush1.bf16.msra.mxu0 %v1007
        %1083 = vmatprep.subr.bf16.mxu0 0
        %1084 = vmatpush1.bf16.msra.mxu0 %v1008
        %1085 = vmatprep.subr.bf16.mxu0 0
        %1086 = vmatpush1.bf16.msra.mxu0 %v1009
        %1087 = vmatprep.subr.bf16.mxu0 0
        %1088 = vmatpush1.bf16.msra.mxu0 %v1010
        %1089 = vmatprep.subr.bf16.mxu0 0
        %1090 = vmatpush1.bf16.msra.mxu0 %v1011
        %1091 = vmatprep.subr.bf16.mxu0 0
        %1092 = vmatpush1.bf16.msra.mxu0 %v1012
        %1093 = vmatprep.subr.bf16.mxu0 0
        %1094 = vmatpush1.bf16.msra.mxu0 0
        %1095 = vmatprep.subr.bf16.mxu0 0
        %1096 = vmatpush1.bf16.msra.mxu0 0
        %1097 = vmatprep.subr.bf16.mxu0 0
        %1098 = vmatpush1.bf16.msra.mxu0 0
        %1099 = vmatprep.subr.bf16.mxu0 0
        %1100 = vmatpush1.bf16.msra.mxu0 0
        %1101 = vmatprep.subr.bf16.mxu0 0
        %1102 = vmatpush1.bf16.msra.mxu0 0
        %1103 = vmatprep.subr.bf16.mxu0 0
        %1104 = vmatpush1.bf16.msra.mxu0 0
        %1105 = vmatprep.subr.bf16.mxu0 0
        %1106 = vmatpush1.bf16.msra.mxu0 0
        %1107 = vmatprep.subr.bf16.mxu0 0
        %1108 = vmatpush1.bf16.msra.mxu0 0
        %1109 = vmatprep.mubr.bf16.mxu0 0
        %1110 = vmatmul.mubr.bf16.gmra.mrb[0].mxu0 %v844
        %v1111 = vpop.f32.mrb[0].mxu0
        %v1112 = vadd.f32 %v1072, %v1111
        %v1113 = vpop.f32.mrb[0].mxu0
        %v1114 = vpop.f32.mrb[0].mxu0
        %v1115 = vpop.f32.mrb[0].mxu0
        %1116 = vdwg.mxu0
        %1117 = vst.msk [vmem:[%s337] sm:$0xff] %vm506, %v1112
        %s1118 = sand.u32 %s165, 1
        %s1119 = scalar_lea.sflag [#allocation4], %s1118
        %s1120 = sand.u32 %s165, 1
        %s1121 = smul.addr %s1120, 8
        %s1122 = scalar_lea.vmem [#allocation13], %s1121
        // Predicated region
        $region69: #{tpu_custom_call.1} parent=43 // pred_check
          %p1123 = pneg %p175
        $region70: #{tpu_custom_call.1} parent=43 // pred_check_branch
          %1125 = sbr.rel (%p1123) target = $region72
        $region71: #{tpu_custom_call.1} parent=43 // pred_region
          %s1127 = ssub.s32 128, 128
          %1128 = vsyncadd %s1119, %s1127
          %s1129 = smul.addr %s26, 128
          %s1130 = scalar_lea.hbm %s6, %s1129
          %s1132 = sshll.u32 %s1122, 4
          %s1133 = int_to_ptr.vmem [resolvable:$true] %s1132
          %1135 = dma.vmem_to_hbm [thread:$0]  %s1133, 128, %s1130, %s1119
        $region72: #{tpu_custom_call.1} parent=43 // pred_fallthru
          _
      $region44: #{tpu_custom_call.1} parent=5 // pred_fallthru
        _
      %p1136 = scmp.le.s32.totalorder 2, %s21
      // Predicated region
      $region73: #{tpu_custom_call.1} parent=5 // pred_check
        %p1137 = pneg %p1136
      $region74: #{tpu_custom_call.1} parent=5 // pred_check_branch
        %1139 = sbr.rel (%p1137) target = $region76
      $region75: #{tpu_custom_call.1} parent=5 // pred_region
        %s1140 = ssub.s32 %s21, 2
        // Predicated region
        $region77: #{tpu_custom_call.1} parent=75 // pred_check
          %p1141 = pneg %p181
        $region78: #{tpu_custom_call.1} parent=75 // pred_check_branch
          %1143 = sbr.rel (%p1141) target = $region80
        $region79: #{tpu_custom_call.1} parent=75 // pred_region
          %s1144 = sand.u32 %s166, 1
          %s1145 = scalar_lea.sflag [#allocation4], %s1144
          %s1146 = sand.u32 %s166, 1
          %s1147 = smul.addr %s1146, 8
          %s1148 = scalar_lea.vmem [#allocation13], %s1147
          %1149 = dma.done %s1145, 128
        $region80: #{tpu_custom_call.1} parent=75 // pred_fallthru
          _
      $region76: #{tpu_custom_call.1} parent=5 // pred_fallthru
        _
    $region6: #{tpu_custom_call.1} parent=1 // loop_footer
      %s25 = sadd.s32 1, %s21
    $region7: #{tpu_custom_call.1} parent=1 // loop_footer_branch
      %20 = sbr.rel target = $region3
    $region8: #{tpu_custom_call.1} parent=1 // loop_exit
      _
    %1150 = vsyncpa [#allocation3], 1
    %s1151 = scalar_lea.sflag [#allocation3], 1
    %1152 = vsyncpa %s1151, 1
    %1153 = vsyncpa [#allocation6], 1
    %1154 = vsyncpa [#allocation9], 1
    %1155 = vsyncpa [#allocation12], 1
    %1156 = vsyncpa [#allocation4], 1
    %s1157 = scalar_lea.sflag [#allocation4], 1
    %1158 = vsyncpa %s1157, 1

</llo_original>
